<compile_context>
chip_gen: v5e
topology: v5e:2x2
jax: 0.10.0
libtpu: 0.0.40
codegen_flags: <defaults>
</compile_context>

<pallas_src>
import functools

import jax
import jax.numpy as jnp
from jax.experimental import pallas as pl
from jax.experimental.pallas import tpu as pltpu

# ---------------- problem sizes (small, deterministic) ----------------
B = 256        # batch (multiple of 128 so lane-dense tiles are unpadded)
C1 = 4         # split_channels[0]
C2 = 4         # split_channels[1]
HIDDEN = 32    # hidden width of the coupling MLP
DTYPE = jnp.float32
TILE_B = 512   # lane-dense batch tile (multiple of 128); capped at B


# ---------------- Pallas kernel ----------------
def _additive_coupling_kernel(xt_ref, w1t_ref, b1t_ref, w2t_ref, b2t_ref,
                              y_ref, *, sign):
    # Channels-first layout: xt (C, TB) with C = C1 + C2 = 8 (one full f32
    # sublane group), TB a multiple of 128 lanes -> dense loads/stores.
    #
    # w1t_ref is W1^T zero-padded to (H, C): columns C1..C-1 are zero, so the
    # x2 rows contribute nothing to the hidden layer.
    # w2t_ref / b2t_ref are zero-padded to (C, H) / (C, 1): rows 0..C1-1 are
    # zero, so m_full has zeros in the pass-through rows and
    #     y = x + sign * m_full
    # leaves x1 untouched while applying +/- m(x1) to x2.
    xt = xt_ref[...]                                              # (C, TB)
    h = jnp.dot(w1t_ref[...], xt,
                preferred_element_type=jnp.float32) + b1t_ref[...]   # (H, TB)
    h = jnp.maximum(h, 0.0)
    m_full = jnp.dot(w2t_ref[...], h,
                     preferred_element_type=jnp.float32) + b2t_ref[...]  # (C, TB)
    y_ref[...] = (xt + sign * m_full).astype(y_ref.dtype)


def additive_coupling(x, w1, b1, w2, b2, *, split_channels=(C1, C2),
                      logdet=None, reverse=False, tile_b=TILE_B):
    """Pallas forward/reverse of AdditiveCoupling. x: (B, sum(split_channels))."""
    assert x.ndim == 2
    c1, c2 = split_channels
    c = c1 + c2
    assert x.shape[-1] == c
    b = x.shape[0]
    hidden = w1.shape[1]
    sign = -1.0 if reverse else 1.0

    # Module-level assumption: lane-dense batch with no padding pass.
    assert b % 128 == 0, "batch must be a multiple of 128"
    tb = min(tile_b, b)
    # TODO(synk): on v7x with large B, pick tb = b // 2 so the 'parallel' grid
    # axis has >= 2 steps and both TensorCores get work.
    grid = (b // tb,)

    # XLA-level layout plumbing (no compute): exactly one transpose in.
    xt = x.T                                        # (C, B) channels-first
    # Zero-pad the tiny coupling-MLP weights once so the kernel stays dense:
    #   W1^T padded with zero columns for the x2 rows  -> (H, C)
    #   W2^T / b2 padded with zero rows for the x1 rows -> (C, H), (C, 1)
    w1t = jnp.concatenate(
        [w1.T, jnp.zeros((hidden, c2), dtype=w1.dtype)], axis=1)   # (H, C)
    b1t = b1.reshape(-1, 1)                                        # (H, 1)
    w2t = jnp.concatenate(
        [jnp.zeros((c1, hidden), dtype=w2.dtype), w2.T], axis=0)   # (C, H)
    b2t = jnp.concatenate(
        [jnp.zeros((c1,), dtype=b2.dtype), b2], axis=0).reshape(-1, 1)  # (C, 1)

    kernel = functools.partial(_additive_coupling_kernel, sign=sign)

    yt = pl.pallas_call(
        kernel,
        out_shape=jax.ShapeDtypeStruct((c, b), x.dtype),
        grid=grid,
        in_specs=[
            pl.BlockSpec((c, tb), lambda i: (0, i)),          # x tile (dense)
            pl.BlockSpec((hidden, c), lambda i: (0, 0)),      # W1^T (resident)
            pl.BlockSpec((hidden, 1), lambda i: (0, 0)),      # b1   (resident)
            pl.BlockSpec((c, hidden), lambda i: (0, 0)),      # W2^T (resident)
            pl.BlockSpec((c, 1), lambda i: (0, 0)),           # b2   (resident)
        ],
        out_specs=pl.BlockSpec((c, tb), lambda i: (0, i)),    # y tile (dense)
        compiler_params=pltpu.CompilerParams(
            dimension_semantics=("parallel",)),
    )(xt, w1t, b1t, w2t, b2t)

    out = yt.T                                                # (B, C)

    # initialize_logdet_if_necessary: int/float -> 0-d array; additive coupling
    # contributes zero to the log-determinant, so logdet passes through.
    if isinstance(logdet, (int, float)):
        logdet = jnp.full((), logdet, dtype=x.dtype)
    if logdet is None:
        return out
    return out, logdet


# ---------------- pure-JAX reference (for a sanity check) ----------------
def _reference(x, w1, b1, w2, b2, reverse=False):
    x1, x2 = x[:, :C1], x[:, C1:]
    m = jnp.maximum(x1 @ w1 + b1, 0.0) @ w2 + b2
    y2 = x2 - m if reverse else x2 + m
    return jnp.concatenate([x1, y2], axis=-1)


if __name__ == "__main__":
    key = jax.random.PRNGKey(0)
    kx, kw1, kb1, kw2, kb2 = jax.random.split(key, 5)

    x = jax.random.normal(kx, (B, C1 + C2), dtype=DTYPE)
    # deterministic synthetic coupling-MLP parameters
    # TODO(synk): the PyTorch module takes an arbitrary `coupling` nn.Module;
    # it is instantiated here as a fixed 2-layer ReLU MLP.
    w1 = jax.random.normal(kw1, (C1, HIDDEN), dtype=DTYPE) * 0.1
    b1 = jax.random.normal(kb1, (HIDDEN,), dtype=DTYPE) * 0.1
    w2 = jax.random.normal(kw2, (HIDDEN, C2), dtype=DTYPE) * 0.1
    b2 = jax.random.normal(kb2, (C2,), dtype=DTYPE) * 0.1

    # forward (with logdet passthrough)
    out, logdet = additive_coupling(x, w1, b1, w2, b2, logdet=0.0)
    out = jax.block_until_ready(out)
    logdet = jax.block_until_ready(logdet)

    ref = _reference(x, w1, b1, w2, b2)
    assert jnp.allclose(out, ref, atol=1e-5, rtol=1e-5)

    # reverse should invert forward
    inv = jax.block_until_ready(
        additive_coupling(out, w1, b1, w2, b2, reverse=True))
    assert jnp.allclose(inv, x, atol=1e-5, rtol=1e-5)
    assert logdet.shape == () and float(logdet) == 0.0

    print("KERNEL_OK")
</pallas_src>

<mosaic_0001>
module attributes {stable_mosaic.version = 11 : i64} {
  func.func @_additive_coupling_kernel(%arg0: i32, %arg1: memref<8x256xf32, #tpu.memory_space<vmem>>, %arg2: memref<32x8xf32, #tpu.memory_space<vmem>>, %arg3: memref<32x1xf32, #tpu.memory_space<vmem>>, %arg4: memref<8x32xf32, #tpu.memory_space<vmem>>, %arg5: memref<8x1xf32, #tpu.memory_space<vmem>>, %arg6: memref<8x256xf32, #tpu.memory_space<vmem>>) attributes {dimension_semantics = [#tpu.dimension_semantics<parallel>], iteration_bounds = array<i64: 1>, scalar_prefetch = 0 : i64, scratch_operands = 0 : i64, tpu.core_type = #tpu.core_type<tc>, window_params = [{transform_indices = @transform_0, window_bounds = array<i64: 8, 256>}, {pipeline_mode = #tpu.pipeline_mode<synchronous>, transform_indices = @transform_1, window_bounds = array<i64: 32, 8>}, {pipeline_mode = #tpu.pipeline_mode<synchronous>, transform_indices = @transform_2, window_bounds = array<i64: 32, 1>}, {pipeline_mode = #tpu.pipeline_mode<synchronous>, transform_indices = @transform_3, window_bounds = array<i64: 8, 32>}, {pipeline_mode = #tpu.pipeline_mode<synchronous>, transform_indices = @transform_4, window_bounds = array<i64: 8, 1>}, {transform_indices = @transform_5, window_bounds = array<i64: 8, 256>}]} {
    %c0 = arith.constant 0 : index
    %c0_0 = arith.constant 0 : index
    %0 = vector.load %arg1[%c0, %c0_0] : memref<8x256xf32, #tpu.memory_space<vmem>>, vector<8x256xf32>
    %c0_1 = arith.constant 0 : index
    %c0_2 = arith.constant 0 : index
    %1 = vector.load %arg2[%c0_1, %c0_2] : memref<32x8xf32, #tpu.memory_space<vmem>>, vector<32x8xf32>
    %cst = arith.constant dense<0.000000e+00> : vector<32x256xf32>
    %2 = tpu.matmul %1, %0, %cst {dimension_numbers = #tpu.dot_dimension_numbers<[1], [0], [0], [1], [0, 0, 1, 1], [], []>} : vector<32x8xf32>, vector<8x256xf32>, vector<32x256xf32> -> vector<32x256xf32>
    %c0_3 = arith.constant 0 : index
    %c0_4 = arith.constant 0 : index
    %3 = vector.load %arg3[%c0_3, %c0_4] : memref<32x1xf32, #tpu.memory_space<vmem>>, vector<32x1xf32>
    %4 = vector.broadcast %3 : vector<32x1xf32> to vector<32x256xf32>
    %5 = arith.addf %2, %4 : vector<32x256xf32>
    %cst_5 = arith.constant 0.000000e+00 : f32
    %6 = vector.broadcast %cst_5 : f32 to vector<32x256xf32>
    %7 = arith.maximumf %5, %6 : vector<32x256xf32>
    %c0_6 = arith.constant 0 : index
    %c0_7 = arith.constant 0 : index
    %8 = vector.load %arg4[%c0_6, %c0_7] : memref<8x32xf32, #tpu.memory_space<vmem>>, vector<8x32xf32>
    %cst_8 = arith.constant dense<0.000000e+00> : vector<8x256xf32>
    %9 = tpu.matmul %8, %7, %cst_8 {dimension_numbers = #tpu.dot_dimension_numbers<[1], [0], [0], [1], [0, 0, 1, 1], [], []>} : vector<8x32xf32>, vector<32x256xf32>, vector<8x256xf32> -> vector<8x256xf32>
    %c0_9 = arith.constant 0 : index
    %c0_10 = arith.constant 0 : index
    %10 = vector.load %arg5[%c0_9, %c0_10] : memref<8x1xf32, #tpu.memory_space<vmem>>, vector<8x1xf32>
    %11 = vector.broadcast %10 : vector<8x1xf32> to vector<8x256xf32>
    %12 = arith.addf %9, %11 : vector<8x256xf32>
    %cst_11 = arith.constant 1.000000e+00 : f32
    %13 = vector.broadcast %cst_11 : f32 to vector<8x256xf32>
    %14 = arith.mulf %13, %12 : vector<8x256xf32>
    %15 = arith.addf %0, %14 : vector<8x256xf32>
    %c0_12 = arith.constant 0 : index
    %c0_13 = arith.constant 0 : index
    %16 = vector.load %arg6[%c0_12, %c0_13] : memref<8x256xf32, #tpu.memory_space<vmem>>, vector<8x256xf32>
    tpu.vector_store %arg6[%c0_12, %c0_13], %15 {strides = array<i32>} : memref<8x256xf32, #tpu.memory_space<vmem>>, vector<8x256xf32>,
    return
  }
  func.func @transform_0(%arg0: i32) -> (i32, i32) {
    %c0_i32 = arith.constant 0 : i32
    %c0_i32_0 = arith.constant 0 : i32
    return %c0_i32, %arg0 : i32, i32
  }
  func.func @transform_1(%arg0: i32) -> (i32, i32) {
    %c0_i32 = arith.constant 0 : i32
    %c0_i32_0 = arith.constant 0 : i32
    %c0_i32_1 = arith.constant 0 : i32
    return %c0_i32, %c0_i32_0 : i32, i32
  }
  func.func @transform_2(%arg0: i32) -> (i32, i32) {
    %c0_i32 = arith.constant 0 : i32
    %c0_i32_0 = arith.constant 0 : i32
    %c0_i32_1 = arith.constant 0 : i32
    return %c0_i32, %c0_i32_0 : i32, i32
  }
  func.func @transform_3(%arg0: i32) -> (i32, i32) {
    %c0_i32 = arith.constant 0 : i32
    %c0_i32_0 = arith.constant 0 : i32
    %c0_i32_1 = arith.constant 0 : i32
    return %c0_i32, %c0_i32_0 : i32, i32
  }
  func.func @transform_4(%arg0: i32) -> (i32, i32) {
    %c0_i32 = arith.constant 0 : i32
    %c0_i32_0 = arith.constant 0 : i32
    %c0_i32_1 = arith.constant 0 : i32
    return %c0_i32, %c0_i32_0 : i32, i32
  }
  func.func @transform_5(%arg0: i32) -> (i32, i32) {
    %c0_i32 = arith.constant 0 : i32
    %c0_i32_0 = arith.constant 0 : i32
    return %c0_i32, %arg0 : i32, i32
  }
}

</mosaic_0001>

<llo_original>
// kernel: tpu_custom_call.1
$region0: #{tpu_custom_call.1}
  #allocation0 [shape = 'u32[]', space=smem, size = 0x4, offset = 0x4, fixed_abs, tag = 'smem constant byte address 0x4 - core index']
  #allocation1 [shape = 'u32[72,128]{1,0:T(1,128)}', space=vmem, size = 0x9000, scoped, tag = 'internal scratch']
  %s0 = inlined_call_operand.vmem [shape: f32[8,256], index: 0, kind: input, shape index: {}]
  %s1 = inlined_call_operand.vmem [shape: f32[32,8], index: 1, kind: input, shape index: {}]
  %s2 = inlined_call_operand.vmem [shape: f32[32,1], index: 2, kind: input, shape index: {}]
  %s3 = inlined_call_operand.vmem [shape: f32[8,32], index: 3, kind: input, shape index: {}]
  %s4 = inlined_call_operand.vmem [shape: f32[8,1], index: 4, kind: input, shape index: {}]
  %s5 = inlined_call_operand.hbm [shape: f32[8,256], index: 5, kind: output, shape index: {}]
  %s6 = sld [smem:[#allocation0]]
  $region30: #{tpu_custom_call.1} parent=0
    _
  %s8 = ssub.s32 1, %s6
  %s9 = scalar_select 0, %s8, %s6
  $region1: #{tpu_custom_call.1} parent=0
    #allocation2 [shape = 'u8[8192]{0}', space=vmem, size = 0x2000, scoped, tag = 'output window, operand 0, single buffered']
    #allocation3 [shape = 's32[1]{0}', space=sflag, size = 0x4, scoped, tag = 'scoped memory for tpu_custom_call.1']
    %10 = vsyncpa [#allocation3], 0
    // Predicated region
    $region2: #{tpu_custom_call.1} parent=1 // pred_check
      _
    $region3: #{tpu_custom_call.1} parent=1 // pred_check_branch
      %12 = sbr.rel (0) target = $region5
    $region4: #{tpu_custom_call.1} parent=1 // pred_region
      _
    $region5: #{tpu_custom_call.1} parent=1 // pred_fallthru
      _
    // Predicated region
    $region6: #{tpu_custom_call.1} parent=1 // pred_check
      _
    $region7: #{tpu_custom_call.1} parent=1 // pred_check_branch
      %14 = sbr.rel (0) target = $region9
    $region8: #{tpu_custom_call.1} parent=1 // pred_region
      _
    $region9: #{tpu_custom_call.1} parent=1 // pred_fallthru
      _
    // Predicated region
    $region10: #{tpu_custom_call.1} parent=1 // pred_check
      _
    $region11: #{tpu_custom_call.1} parent=1 // pred_check_branch
      %16 = sbr.rel (0) target = $region13
    $region12: #{tpu_custom_call.1} parent=1 // pred_region
      _
    $region13: #{tpu_custom_call.1} parent=1 // pred_fallthru
      _
    // Predicated region
    $region14: #{tpu_custom_call.1} parent=1 // pred_check
      _
    $region15: #{tpu_custom_call.1} parent=1 // pred_check_branch
      %18 = sbr.rel (0) target = $region17
    $region16: #{tpu_custom_call.1} parent=1 // pred_region
      _
    $region17: #{tpu_custom_call.1} parent=1 // pred_fallthru
      _
    // Predicated region
    $region18: #{tpu_custom_call.1} parent=1 // pred_check
      _
    $region19: #{tpu_custom_call.1} parent=1 // pred_check_branch
      %20 = sbr.rel (0) target = $region21
    $region20: #{tpu_custom_call.1} parent=1 // pred_region
      _
    $region21: #{tpu_custom_call.1} parent=1 // pred_fallthru
      _
    %v21 = vld [vmem:[%s0] sm:$0xff]
    %v22 = vld [vmem:[%s0 + $0x8] sm:$0xff]
    %v23 = vld [vmem:[%s1] sm:$0xff]
    %v24 = vld [vmem:[%s1 + $0x8] sm:$0xff]
    %v25 = vld [vmem:[%s1 + $0x10] sm:$0xff]
    %v26 = vld [vmem:[%s1 + $0x18] sm:$0xff]
    %v27 = vld [vmem:[%s2] sm:$0xff]
    %v28 = vld [vmem:[%s2 + $0x8] sm:$0xff]
    %v29 = vld [vmem:[%s2 + $0x10] sm:$0xff]
    %v30 = vld [vmem:[%s2 + $0x18] sm:$0xff]
    %32 = vset.pattern.permute.xlu0 0
    %33 = vperm.xlu0 %32, %v27
    %v34 = vpop.permute.xlu0 %33
    %37 = vset.pattern.permute.xlu0 0
    %38 = vperm.xlu0 %37, %v28
    %v39 = vpop.permute.xlu0 %38
    %42 = vset.pattern.permute.xlu0 0
    %43 = vperm.xlu0 %42, %v29
    %v44 = vpop.permute.xlu0 %43
    %47 = vset.pattern.permute.xlu0 0
    %48 = vperm.xlu0 %47, %v30
    %v49 = vpop.permute.xlu0 %48
    %vm51 = vcmask 64512
    %v53 = vsel %vm51, %v23, 0
    %v56 = vsel %vm51, %v24, 0
    %v59 = vsel %vm51, %v25, 0
    %v62 = vsel %vm51, %v26, 0
    %64 = vmatpush.msra.mxu0 0.0
    %65 = vmatpush.msra.mxu0 0.0
    %66 = vmatpush.msra.mxu0 0.0
    %67 = vmatpush.msra.mxu0 0.0
    %68 = vmatpush.msra.mxu0 0.0
    %69 = vmatpush.msra.mxu0 0.0
    %70 = vmatpush.msra.mxu0 0.0
    %71 = vmatpush.msra.mxu0 0.0
    %72 = vmatpush.msra.mxu0 0.0
    %73 = vmatpush.msra.mxu0 0.0
    %74 = vmatpush.msra.mxu0 0.0
    %75 = vmatpush.msra.mxu0 0.0
    %76 = vmatpush.msra.mxu0 0.0
    %77 = vmatpush.msra.mxu0 0.0
    %78 = vmatpush.msra.mxu0 0.0
    %79 = vmatpush.msra.mxu0 %v21
    %80 = vmatmul.f32.gmra.mxu0 %v53
    %v81 = vpop.f32.mrf.mxu0
    %v82 = vadd.f32 %v34, %v81
    %83 = vmatmul.f32.gmra.mxu0 %v56
    %v84 = vpop.f32.mrf.mxu0
    %v85 = vadd.f32 %v39, %v84
    %86 = vmatmul.f32.gmra.mxu0 %v59
    %v87 = vpop.f32.mrf.mxu0
    %v88 = vadd.f32 %v44, %v87
    %89 = vmatmul.f32.gmra.mxu0 %v62
    %v90 = vpop.f32.mrf.mxu0
    %v91 = vadd.f32 %v49, %v90
    %92 = vdwg.mxu0
    %93 = vmatpush.msra.mxu0 0.0
    %94 = vmatpush.msra.mxu0 0.0
    %95 = vmatpush.msra.mxu0 0.0
    %96 = vmatpush.msra.mxu0 0.0
    %97 = vmatpush.msra.mxu0 0.0
    %98 = vmatpush.msra.mxu0 0.0
    %99 = vmatpush.msra.mxu0 0.0
    %100 = vmatpush.msra.mxu0 0.0
    %101 = vmatpush.msra.mxu0 0.0
    %102 = vmatpush.msra.mxu0 0.0
    %103 = vmatpush.msra.mxu0 0.0
    %104 = vmatpush.msra.mxu0 0.0
    %105 = vmatpush.msra.mxu0 0.0
    %106 = vmatpush.msra.mxu0 0.0
    %107 = vmatpush.msra.mxu0 0.0
    %108 = vmatpush.msra.mxu0 %v22
    %109 = vmatmul.f32.gmra.mxu0 %v53
    %v110 = vpop.f32.mrf.mxu0
    %v111 = vadd.f32 %v34, %v110
    %112 = vmatmul.f32.gmra.mxu0 %v56
    %v113 = vpop.f32.mrf.mxu0
    %v114 = vadd.f32 %v39, %v113
    %115 = vmatmul.f32.gmra.mxu0 %v59
    %v116 = vpop.f32.mrf.mxu0
    %v117 = vadd.f32 %v44, %v116
    %118 = vmatmul.f32.gmra.mxu0 %v62
    %v119 = vpop.f32.mrf.mxu0
    %v120 = vadd.f32 %v49, %v119
    %121 = vdwg.mxu0
    %v122 = vmax.f32 %v82, 0.0
    %v123 = vmax.f32 %v111, 0.0
    %v124 = vmax.f32 %v85, 0.0
    %v125 = vmax.f32 %v114, 0.0
    %v126 = vmax.f32 %v88, 0.0
    %v127 = vmax.f32 %v117, 0.0
    %v128 = vmax.f32 %v91, 0.0
    %v129 = vmax.f32 %v120, 0.0
    %v130 = vld [vmem:[%s3] sm:$0xff]
    %v131 = vld [vmem:[%s4] sm:$0xff]
    %133 = vset.pattern.permute.xlu0 0
    %134 = vperm.xlu0 %133, %v131
    %v135 = vpop.permute.xlu0 %134
    %vm137 = vcmask 261120
    %v139 = vsel %vm137, %v130, 0
    %141 = vmatpush.msra.mxu0 0.0
    %142 = vmatpush.msra.mxu0 0.0
    %143 = vmatpush.msra.mxu0 0.0
    %144 = vmatpush.msra.mxu0 0.0
    %145 = vmatpush.msra.mxu0 0.0
    %146 = vmatpush.msra.mxu0 0.0
    %147 = vmatpush.msra.mxu0 0.0
    %148 = vmatpush.msra.mxu0 0.0
    %149 = vmatpush.msra.mxu0 0.0
    %150 = vmatpush.msra.mxu0 0.0
    %151 = vmatpush.msra.mxu0 0.0
    %152 = vmatpush.msra.mxu0 0.0
    %153 = vmatpush.msra.mxu0 %v128
    %154 = vmatpush.msra.mxu0 %v126
    %155 = vmatpush.msra.mxu0 %v124
    %156 = vmatpush.msra.mxu0 %v122
    %157 = vmatmul.f32.gmra.mxu0 %v139
    %v158 = vpop.f32.mrf.mxu0
    %v159 = vadd.f32 %v135, %v158
    %160 = vdwg.mxu0
    %161 = vmatpush.msra.mxu0 0.0
    %162 = vmatpush.msra.mxu0 0.0
    %163 = vmatpush.msra.mxu0 0.0
    %164 = vmatpush.msra.mxu0 0.0
    %165 = vmatpush.msra.mxu0 0.0
    %166 = vmatpush.msra.mxu0 0.0
    %167 = vmatpush.msra.mxu0 0.0
    %168 = vmatpush.msra.mxu0 0.0
    %169 = vmatpush.msra.mxu0 0.0
    %170 = vmatpush.msra.mxu0 0.0
    %171 = vmatpush.msra.mxu0 0.0
    %172 = vmatpush.msra.mxu0 0.0
    %173 = vmatpush.msra.mxu0 %v129
    %174 = vmatpush.msra.mxu0 %v127
    %175 = vmatpush.msra.mxu0 %v125
    %176 = vmatpush.msra.mxu0 %v123
    %177 = vmatmul.f32.gmra.mxu0 %v139
    %v178 = vpop.f32.mrf.mxu0
    %v179 = vadd.f32 %v135, %v178
    %180 = vdwg.mxu0
    %v181 = vadd.f32 %v21, %v159
    %v182 = vadd.f32 %v22, %v179
    %183 = vst [vmem:[#allocation2] sm:$0xff] %v181
    %184 = vst [vmem:[#allocation2 + $0x8] sm:$0xff] %v182
    // Predicated region
    $region22: #{tpu_custom_call.1} parent=1 // pred_check
      _
    $region23: #{tpu_custom_call.1} parent=1 // pred_check_branch
      %186 = sbr.rel (0) target = $region25
    $region24: #{tpu_custom_call.1} parent=1 // pred_region
      %188 = vsyncadd [#allocation3], 0
      %s190 = sshll.u32 [#allocation2], 4
      %s191 = int_to_ptr.vmem [resolvable:$true] %s190
      %s192 = sshll.u32 %s5, 4
      %s193 = int_to_ptr.hbm [resolvable:$true] %s192
      %195 = dma.vmem_to_hbm [thread:$0]  %s191, 256, %s193, [#allocation3]
    $region25: #{tpu_custom_call.1} parent=1 // pred_fallthru
      _
    // Predicated region
    $region26: #{tpu_custom_call.1} parent=1 // pred_check
      _
    $region27: #{tpu_custom_call.1} parent=1 // pred_check_branch
      %197 = sbr.rel (0) target = $region29
    $region28: #{tpu_custom_call.1} parent=1 // pred_region
      %199 = dma.done [#allocation3], 256
    $region29: #{tpu_custom_call.1} parent=1 // pred_fallthru
      _
    %200 = vsyncpa [#allocation3], 1

</llo_original>
